<compile_context>
chip_gen: v6e
topology: v6e:2x2x1
jax: 0.10.0
libtpu: 0.0.40
codegen_flags: <defaults>
</compile_context>

<pallas_src>
import functools
import math

import jax
import jax.numpy as jnp
from jax.experimental import pallas as pl
from jax.experimental.pallas import tpu as pltpu


# ---------------------------------------------------------------------------
# Fused Pallas kernel: per-head projection + attention + accumulated W_o
# ---------------------------------------------------------------------------

def _mha_head_kernel(q_ref, k_ref, v_ref, wq_ref, wk_ref, wv_ref, wo_ref,
                     o_ref, acc_ref, *, head_dim):
    h = pl.program_id(1)

    @pl.when(h == 0)
    def _init():
        acc_ref[...] = jnp.zeros_like(acc_ref)

    bb, seq, fq = q_ref.shape
    fk = k_ref.shape[-1]
    fv = v_ref.shape[-1]

    # bf16 MXU operands, f32 accumulation.  Leading dims merged so all
    # projections are plain 2-D MXU dots.
    q_in = q_ref[...].astype(jnp.bfloat16).reshape(bb * seq, fq)
    k_in = k_ref[...].astype(jnp.bfloat16).reshape(bb * seq, fk)
    v_in = v_ref[...].astype(jnp.bfloat16).reshape(bb * seq, fv)

    wq = wq_ref[...].astype(jnp.bfloat16)      # (fq, D)  -- this head's columns
    wk = wk_ref[...].astype(jnp.bfloat16)      # (fk, D)
    wv = wv_ref[...].astype(jnp.bfloat16)      # (fv, D)

    q_h = jnp.dot(q_in, wq, preferred_element_type=jnp.float32)   # (bb*L, D) f32
    k_h = jnp.dot(k_in, wk, preferred_element_type=jnp.float32)
    v_h = jnp.dot(v_in, wv, preferred_element_type=jnp.float32)

    # Scale the scores' left operand (the module's permuted "queries", i.e.
    # v_proj) before the matmul: O(L*D) VPU work instead of O(L^2).
    v_h = v_h * (1.0 / math.sqrt(head_dim))

    q_h = q_h.reshape(bb, seq, head_dim).astype(jnp.bfloat16)
    k_h = k_h.reshape(bb, seq, head_dim).astype(jnp.bfloat16)
    v_h = v_h.reshape(bb, seq, head_dim).astype(jnp.bfloat16)

    # DotProductAttention.forward(keys, queries, values) is called as
    # self.attention(q_proj, v_proj, k_proj), i.e.:
    #   scores  = v_proj @ q_proj^T / sqrt(D)
    #   weights = softmax(scores, axis=-1)          (dropout p=0 -> identity)
    #   out     = weights @ k_proj
    scores = jnp.einsum("bld,bmd->blm", v_h, q_h,
                        preferred_element_type=jnp.float32)        # (bb, L, L) f32
    m = jnp.max(scores, axis=-1, keepdims=True)
    e = jnp.exp(scores - m)
    denom = jnp.sum(e, axis=-1, keepdims=True)
    weights = (e * pl.reciprocal(denom, approx=True)).astype(jnp.bfloat16)

    attn = jnp.einsum("blm,bmd->bld", weights, k_h,
                      preferred_element_type=jnp.float32)          # (bb, L, D) f32

    # This head's contribution to the output projection, accumulated in f32.
    wo = wo_ref[...].astype(jnp.bfloat16)      # (D, fo)  -- this head's rows of W_o
    contrib = jnp.dot(attn.reshape(bb * seq, head_dim).astype(jnp.bfloat16), wo,
                      preferred_element_type=jnp.float32)
    acc_ref[...] += contrib.reshape(acc_ref.shape)

    @pl.when(h == pl.num_programs(1) - 1)
    def _store():
        o_ref[...] = acc_ref[...].astype(o_ref.dtype)


def multi_head_attention(params, queries, keys, values, num_heads, *,
                         batch_tile=None):
    """Single fused pallas_call, grid = (batch tiles, heads)."""
    B, L, fq = queries.shape
    _, _, fk = keys.shape
    _, _, fv = values.shape
    hd = params["w_q"].shape[1]
    d = hd // num_heads
    fo = params["w_o"].shape[1]

    if batch_tile is None:
        batch_tile = B          # single grid step over batch (best on v5e/v6e)
    nb = B // batch_tile        # set batch_tile=1 on v7x to use both TCs

    # Wrapper-side layout plumbing: expose heads as a leading axis so each
    # head's weight slice is a full-extent (in, D) / (D, out) block for the
    # BlockSpec DMA — no sub-128-lane slicing inside the kernel.
    wq_h = params["w_q"].reshape(fq, num_heads, d).transpose(1, 0, 2)  # (H, fq, D)
    wk_h = params["w_k"].reshape(fk, num_heads, d).transpose(1, 0, 2)  # (H, fk, D)
    wv_h = params["w_v"].reshape(fv, num_heads, d).transpose(1, 0, 2)  # (H, fv, D)
    wo_h = params["w_o"].reshape(num_heads, d, fo)                     # (H, D, fo)

    kernel = functools.partial(_mha_head_kernel, head_dim=d)
    return pl.pallas_call(
        kernel,
        out_shape=jax.ShapeDtypeStruct((B, L, fo), queries.dtype),
        grid=(nb, num_heads),
        in_specs=[
            # activations: constant block index over the head axis -> DMAed once
            pl.BlockSpec((batch_tile, L, fq), lambda b, h: (b, 0, 0)),
            pl.BlockSpec((batch_tile, L, fk), lambda b, h: (b, 0, 0)),
            pl.BlockSpec((batch_tile, L, fv), lambda b, h: (b, 0, 0)),
            # per-head weight blocks, leading head dim squeezed away
            pl.BlockSpec((pl.Squeezed(), fq, d), lambda b, h: (h, 0, 0)),
            pl.BlockSpec((pl.Squeezed(), fk, d), lambda b, h: (h, 0, 0)),
            pl.BlockSpec((pl.Squeezed(), fv, d), lambda b, h: (h, 0, 0)),
            pl.BlockSpec((pl.Squeezed(), d, fo), lambda b, h: (h, 0, 0)),
        ],
        out_specs=pl.BlockSpec((batch_tile, L, fo), lambda b, h: (b, 0, 0)),
        scratch_shapes=[pltpu.VMEM((batch_tile, L, fo), jnp.float32)],
        compiler_params=pltpu.CompilerParams(
            dimension_semantics=("parallel", "arbitrary"),
            vmem_limit_bytes=32 * 1024 * 1024),  # explicit budget; safe on v5e..v7x
    )(queries, keys, values, wq_h, wk_h, wv_h, wo_h)


# ---------------------------------------------------------------------------
# Pure-jnp reference (mirrors the PyTorch forward exactly) + param init
# ---------------------------------------------------------------------------

def transpose_input(x, num_heads):
    # (B, L, H*D) -> (B*H, L, D)   [d2l transpose_qkv]
    B, L, F = x.shape
    x = x.reshape(B, L, num_heads, F // num_heads)
    x = jnp.transpose(x, (0, 2, 1, 3))
    return x.reshape(B * num_heads, L, F // num_heads)


def transpose_output(x, num_heads):
    # (B*H, L, D) -> (B, L, H*D)
    BH, L, D = x.shape
    B = BH // num_heads
    x = x.reshape(B, num_heads, L, D)
    x = jnp.transpose(x, (0, 2, 1, 3))
    return x.reshape(B, L, num_heads * D)


def reference(params, queries, keys, values, num_heads):
    q = transpose_input(queries @ params["w_q"], num_heads)
    v = transpose_input(values @ params["w_v"], num_heads)
    k = transpose_input(keys @ params["w_k"], num_heads)
    d = v.shape[-1]
    scores = jnp.einsum("bip,bjp->bij", v, q) / math.sqrt(d)
    w = jax.nn.softmax(scores, axis=-1)
    out = jnp.einsum("bij,bjd->bid", w, k)
    return transpose_output(out, num_heads) @ params["w_o"]


def init_params(key, key_size, query_size, value_size, num_hiddens, num_heads):
    # Weights stored as (in_features, out_features) so y = x @ W reproduces
    # PyTorch's x @ weight.T for bias-free nn.Linear.
    k1, k2, k3, k4 = jax.random.split(key, 4)
    scale = 0.1
    hid = num_hiddens * num_heads
    return {
        "w_q": scale * jax.random.normal(k1, (query_size, hid), jnp.float32),
        "w_k": scale * jax.random.normal(k2, (key_size, hid), jnp.float32),
        "w_v": scale * jax.random.normal(k3, (value_size, hid), jnp.float32),
        "w_o": scale * jax.random.normal(k4, (hid, query_size), jnp.float32),
    }


if __name__ == "__main__":
    # module hyper-parameters
    key_size = query_size = value_size = 16
    num_hiddens = 8          # per-head hidden size (w_q out = num_hiddens*num_heads)
    num_heads = 4
    dropout = 0.0            # identity; matches eval-mode / p=0 dropout

    B, L = 2, 8              # the permuted attention call requires Lq == Lk == Lv

    root = jax.random.PRNGKey(0)
    kp, kq, kk, kv = jax.random.split(root, 4)
    params = init_params(kp, key_size, query_size, value_size,
                         num_hiddens, num_heads)
    queries = jax.random.normal(kq, (B, L, query_size), jnp.float32)
    keys = jax.random.normal(kk, (B, L, key_size), jnp.float32)
    values = jax.random.normal(kv, (B, L, value_size), jnp.float32)

    out = multi_head_attention(params, queries, keys, values, num_heads)
    out = jax.block_until_ready(out)

    ref = reference(params, queries, keys, values, num_heads)
    assert out.shape == (B, L, query_size)
    # bf16 MXU operands + approx reciprocal -> bf16-level tolerance vs f32 ref.
    assert jnp.allclose(out, ref, atol=2e-2, rtol=2e-2), \
        float(jnp.max(jnp.abs(out - ref)))

    print("KERNEL_OK")
</pallas_src>

<mosaic_0001>
module attributes {stable_mosaic.version = 11 : i64} {
  func.func @_mha_head_kernel(%arg0: i32, %arg1: i32, %arg2: memref<2x8x16xf32, #tpu.memory_space<vmem>>, %arg3: memref<2x8x16xf32, #tpu.memory_space<vmem>>, %arg4: memref<2x8x16xf32, #tpu.memory_space<vmem>>, %arg5: memref<1x16x8xf32, #tpu.memory_space<vmem>>, %arg6: memref<1x16x8xf32, #tpu.memory_space<vmem>>, %arg7: memref<1x16x8xf32, #tpu.memory_space<vmem>>, %arg8: memref<1x8x16xf32, #tpu.memory_space<vmem>>, %arg9: memref<2x8x16xf32, #tpu.memory_space<vmem>>, %arg10: memref<2x8x16xf32, #tpu.memory_space<vmem>>) attributes {dimension_semantics = [#tpu.dimension_semantics<parallel>, #tpu.dimension_semantics<arbitrary>], iteration_bounds = array<i64: 1, 4>, scalar_prefetch = 0 : i64, scratch_operands = 1 : i64, tpu.core_type = #tpu.core_type<tc>, window_params = [{transform_indices = @transform_0, window_bounds = array<i64: 2, 8, 16>}, {transform_indices = @transform_1, window_bounds = array<i64: 2, 8, 16>}, {transform_indices = @transform_2, window_bounds = array<i64: 2, 8, 16>}, {transform_indices = @transform_3, window_bounds = array<i64: 1, 16, 8>}, {transform_indices = @transform_4, window_bounds = array<i64: 1, 16, 8>}, {transform_indices = @transform_5, window_bounds = array<i64: 1, 16, 8>}, {transform_indices = @transform_6, window_bounds = array<i64: 1, 8, 16>}, {transform_indices = @transform_7, window_bounds = array<i64: 2, 8, 16>}]} {
    %c0_i32 = arith.constant 0 : i32
    %0 = arith.cmpi eq, %arg1, %c0_i32 : i32
    %1 = arith.extui %0 : i1 to i32
    %c0_i32_0 = arith.constant 0 : i32
    %2 = arith.cmpi ne, %1, %c0_i32_0 : i32
    scf.if %2 {
      %cst_36 = arith.constant 0.000000e+00 : f32
      %58 = vector.broadcast %cst_36 : f32 to vector<2x8x16xf32>
      %c0_37 = arith.constant 0 : index
      %c0_38 = arith.constant 0 : index
      %c0_39 = arith.constant 0 : index
      %59 = vector.load %arg10[%c0_37, %c0_38, %c0_39] : memref<2x8x16xf32, #tpu.memory_space<vmem>>, vector<2x8x16xf32>
      tpu.vector_store %arg10[%c0_37, %c0_38, %c0_39], %58 {strides = array<i32>} : memref<2x8x16xf32, #tpu.memory_space<vmem>>, vector<2x8x16xf32>,
    } else {
    }
    %c0 = arith.constant 0 : index
    %c0_1 = arith.constant 0 : index
    %c0_2 = arith.constant 0 : index
    %3 = vector.load %arg2[%c0, %c0_1, %c0_2] : memref<2x8x16xf32, #tpu.memory_space<vmem>>, vector<2x8x16xf32>
    %4 = arith.truncf %3 : vector<2x8x16xf32> to vector<2x8x16xbf16>
    %5 = vector.shape_cast %4 : vector<2x8x16xbf16> to vector<16x16xbf16>
    %c0_3 = arith.constant 0 : index
    %c0_4 = arith.constant 0 : index
    %c0_5 = arith.constant 0 : index
    %6 = vector.load %arg3[%c0_3, %c0_4, %c0_5] : memref<2x8x16xf32, #tpu.memory_space<vmem>>, vector<2x8x16xf32>
    %7 = arith.truncf %6 : vector<2x8x16xf32> to vector<2x8x16xbf16>
    %8 = vector.shape_cast %7 : vector<2x8x16xbf16> to vector<16x16xbf16>
    %c0_6 = arith.constant 0 : index
    %c0_7 = arith.constant 0 : index
    %c0_8 = arith.constant 0 : index
    %9 = vector.load %arg4[%c0_6, %c0_7, %c0_8] : memref<2x8x16xf32, #tpu.memory_space<vmem>>, vector<2x8x16xf32>
    %10 = arith.truncf %9 : vector<2x8x16xf32> to vector<2x8x16xbf16>
    %11 = vector.shape_cast %10 : vector<2x8x16xbf16> to vector<16x16xbf16>
    %c0_9 = arith.constant 0 : index
    %c0_10 = arith.constant 0 : index
    %c0_11 = arith.constant 0 : index
    %12 = vector.load %arg5[%c0_9, %c0_10, %c0_11] : memref<1x16x8xf32, #tpu.memory_space<vmem>>, vector<1x16x8xf32>
    %13 = vector.shape_cast %12 : vector<1x16x8xf32> to vector<16x8xf32>
    %14 = arith.truncf %13 : vector<16x8xf32> to vector<16x8xbf16>
    %c0_12 = arith.constant 0 : index
    %c0_13 = arith.constant 0 : index
    %c0_14 = arith.constant 0 : index
    %15 = vector.load %arg6[%c0_12, %c0_13, %c0_14] : memref<1x16x8xf32, #tpu.memory_space<vmem>>, vector<1x16x8xf32>
    %16 = vector.shape_cast %15 : vector<1x16x8xf32> to vector<16x8xf32>
    %17 = arith.truncf %16 : vector<16x8xf32> to vector<16x8xbf16>
    %c0_15 = arith.constant 0 : index
    %c0_16 = arith.constant 0 : index
    %c0_17 = arith.constant 0 : index
    %18 = vector.load %arg7[%c0_15, %c0_16, %c0_17] : memref<1x16x8xf32, #tpu.memory_space<vmem>>, vector<1x16x8xf32>
    %19 = vector.shape_cast %18 : vector<1x16x8xf32> to vector<16x8xf32>
    %20 = arith.truncf %19 : vector<16x8xf32> to vector<16x8xbf16>
    %cst = arith.constant dense<0.000000e+00> : vector<16x8xf32>
    %21 = tpu.matmul %5, %14, %cst {dimension_numbers = #tpu.dot_dimension_numbers<[1], [0], [0], [1], [0, 0, 1, 1], [], []>} : vector<16x16xbf16>, vector<16x8xbf16>, vector<16x8xf32> -> vector<16x8xf32>
    %cst_18 = arith.constant dense<0.000000e+00> : vector<16x8xf32>
    %22 = tpu.matmul %8, %17, %cst_18 {dimension_numbers = #tpu.dot_dimension_numbers<[1], [0], [0], [1], [0, 0, 1, 1], [], []>} : vector<16x16xbf16>, vector<16x8xbf16>, vector<16x8xf32> -> vector<16x8xf32>
    %cst_19 = arith.constant dense<0.000000e+00> : vector<16x8xf32>
    %23 = tpu.matmul %11, %20, %cst_19 {dimension_numbers = #tpu.dot_dimension_numbers<[1], [0], [0], [1], [0, 0, 1, 1], [], []>} : vector<16x16xbf16>, vector<16x8xbf16>, vector<16x8xf32> -> vector<16x8xf32>
    %cst_20 = arith.constant 0.353553385 : f32
    %24 = vector.broadcast %cst_20 : f32 to vector<16x8xf32>
    %25 = arith.mulf %23, %24 : vector<16x8xf32>
    %26 = vector.shape_cast %21 : vector<16x8xf32> to vector<2x8x8xf32>
    %27 = arith.truncf %26 : vector<2x8x8xf32> to vector<2x8x8xbf16>
    %28 = vector.shape_cast %22 : vector<16x8xf32> to vector<2x8x8xf32>
    %29 = arith.truncf %28 : vector<2x8x8xf32> to vector<2x8x8xbf16>
    %30 = vector.shape_cast %25 : vector<16x8xf32> to vector<2x8x8xf32>
    %31 = arith.truncf %30 : vector<2x8x8xf32> to vector<2x8x8xbf16>
    "tpu.trace_start"() <{level = 10 : i32, message = "bld,bmd->blm"}> : () -> ()
    %cst_21 = arith.constant dense<0.000000e+00> : vector<2x8x8xf32>
    %32 = tpu.matmul %31, %27, %cst_21 {dimension_numbers = #tpu.dot_dimension_numbers<[2], [2], [1], [1], [0, 0, 0, 1, 1, 1], [0], [0]>} : vector<2x8x8xbf16>, vector<2x8x8xbf16>, vector<2x8x8xf32> -> vector<2x8x8xf32>
    "tpu.trace_stop"() : () -> ()
    %cst_22 = arith.constant dense<0xFF800000> : vector<2x8xf32>
    %33 = vector.multi_reduction <maximumf>, %32, %cst_22 [2] : vector<2x8x8xf32> to vector<2x8xf32>
    %34 = vector.shape_cast %33 : vector<2x8xf32> to vector<2x8x1xf32>
    %35 = vector.broadcast %34 : vector<2x8x1xf32> to vector<2x8x8xf32>
    %36 = arith.subf %32, %35 : vector<2x8x8xf32>
    %37 = math.exp %36 : vector<2x8x8xf32>
    %cst_23 = arith.constant dense<0.000000e+00> : vector<2x8xf32>
    %38 = vector.multi_reduction <add>, %37, %cst_23 [2] : vector<2x8x8xf32> to vector<2x8xf32>
    %39 = vector.shape_cast %38 : vector<2x8xf32> to vector<2x8x1xf32>
    %40 = tpu.reciprocal %39 {approx = true} : vector<2x8x1xf32> -> vector<2x8x1xf32>
    %41 = vector.broadcast %40 : vector<2x8x1xf32> to vector<2x8x8xf32>
    %42 = arith.mulf %37, %41 : vector<2x8x8xf32>
    %43 = arith.truncf %42 : vector<2x8x8xf32> to vector<2x8x8xbf16>
    "tpu.trace_start"() <{level = 10 : i32, message = "blm,bmd->bld"}> : () -> ()
    %cst_24 = arith.constant dense<0.000000e+00> : vector<2x8x8xf32>
    %44 = tpu.matmul %43, %29, %cst_24 {dimension_numbers = #tpu.dot_dimension_numbers<[2], [1], [1], [2], [0, 0, 0, 1, 1, 2], [0], [0]>} : vector<2x8x8xbf16>, vector<2x8x8xbf16>, vector<2x8x8xf32> -> vector<2x8x8xf32>
    "tpu.trace_stop"() : () -> ()
    %c0_25 = arith.constant 0 : index
    %c0_26 = arith.constant 0 : index
    %c0_27 = arith.constant 0 : index
    %45 = vector.load %arg8[%c0_25, %c0_26, %c0_27] : memref<1x8x16xf32, #tpu.memory_space<vmem>>, vector<1x8x16xf32>
    %46 = vector.shape_cast %45 : vector<1x8x16xf32> to vector<8x16xf32>
    %47 = arith.truncf %46 : vector<8x16xf32> to vector<8x16xbf16>
    %48 = vector.shape_cast %44 : vector<2x8x8xf32> to vector<16x8xf32>
    %49 = arith.truncf %48 : vector<16x8xf32> to vector<16x8xbf16>
    %cst_28 = arith.constant dense<0.000000e+00> : vector<16x16xf32>
    %50 = tpu.matmul %49, %47, %cst_28 {dimension_numbers = #tpu.dot_dimension_numbers<[1], [0], [0], [1], [0, 0, 1, 1], [], []>} : vector<16x8xbf16>, vector<8x16xbf16>, vector<16x16xf32> -> vector<16x16xf32>
    %c0_29 = arith.constant 0 : index
    %c0_30 = arith.constant 0 : index
    %c0_31 = arith.constant 0 : index
    %51 = vector.load %arg10[%c0_29, %c0_30, %c0_31] : memref<2x8x16xf32, #tpu.memory_space<vmem>>, vector<2x8x16xf32>
    %52 = vector.shape_cast %50 : vector<16x16xf32> to vector<2x8x16xf32>
    %53 = arith.addf %51, %52 : vector<2x8x16xf32>
    %c0_32 = arith.constant 0 : index
    %c0_33 = arith.constant 0 : index
    %c0_34 = arith.constant 0 : index
    %54 = vector.load %arg10[%c0_32, %c0_33, %c0_34] : memref<2x8x16xf32, #tpu.memory_space<vmem>>, vector<2x8x16xf32>
    tpu.vector_store %arg10[%c0_32, %c0_33, %c0_34], %53 {strides = array<i32>} : memref<2x8x16xf32, #tpu.memory_space<vmem>>, vector<2x8x16xf32>,
    %c3_i32 = arith.constant 3 : i32
    %55 = arith.cmpi eq, %arg1, %c3_i32 : i32
    %56 = arith.extui %55 : i1 to i32
    %c0_i32_35 = arith.constant 0 : i32
    %57 = arith.cmpi ne, %56, %c0_i32_35 : i32
    scf.if %57 {
      %c0_36 = arith.constant 0 : index
      %c0_37 = arith.constant 0 : index
      %c0_38 = arith.constant 0 : index
      %58 = vector.load %arg10[%c0_36, %c0_37, %c0_38] : memref<2x8x16xf32, #tpu.memory_space<vmem>>, vector<2x8x16xf32>
      %c0_39 = arith.constant 0 : index
      %c0_40 = arith.constant 0 : index
      %c0_41 = arith.constant 0 : index
      %59 = vector.load %arg9[%c0_39, %c0_40, %c0_41] : memref<2x8x16xf32, #tpu.memory_space<vmem>>, vector<2x8x16xf32>
      tpu.vector_store %arg9[%c0_39, %c0_40, %c0_41], %58 {strides = array<i32>} : memref<2x8x16xf32, #tpu.memory_space<vmem>>, vector<2x8x16xf32>,
    } else {
    }
    return
  }
  func.func @transform_0(%arg0: i32, %arg1: i32) -> (i32, i32, i32) {
    %c0_i32 = arith.constant 0 : i32
    %c0_i32_0 = arith.constant 0 : i32
    %c0_i32_1 = arith.constant 0 : i32
    return %arg0, %c0_i32, %c0_i32_0 : i32, i32, i32
  }
  func.func @transform_1(%arg0: i32, %arg1: i32) -> (i32, i32, i32) {
    %c0_i32 = arith.constant 0 : i32
    %c0_i32_0 = arith.constant 0 : i32
    %c0_i32_1 = arith.constant 0 : i32
    return %arg0, %c0_i32, %c0_i32_0 : i32, i32, i32
  }
  func.func @transform_2(%arg0: i32, %arg1: i32) -> (i32, i32, i32) {
    %c0_i32 = arith.constant 0 : i32
    %c0_i32_0 = arith.constant 0 : i32
    %c0_i32_1 = arith.constant 0 : i32
    return %arg0, %c0_i32, %c0_i32_0 : i32, i32, i32
  }
  func.func @transform_3(%arg0: i32, %arg1: i32) -> (i32, i32, i32) {
    %c0_i32 = arith.constant 0 : i32
    %c0_i32_0 = arith.constant 0 : i32
    %c0_i32_1 = arith.constant 0 : i32
    return %arg1, %c0_i32, %c0_i32_0 : i32, i32, i32
  }
  func.func @transform_4(%arg0: i32, %arg1: i32) -> (i32, i32, i32) {
    %c0_i32 = arith.constant 0 : i32
    %c0_i32_0 = arith.constant 0 : i32
    %c0_i32_1 = arith.constant 0 : i32
    return %arg1, %c0_i32, %c0_i32_0 : i32, i32, i32
  }
  func.func @transform_5(%arg0: i32, %arg1: i32) -> (i32, i32, i32) {
    %c0_i32 = arith.constant 0 : i32
    %c0_i32_0 = arith.constant 0 : i32
    %c0_i32_1 = arith.constant 0 : i32
    return %arg1, %c0_i32, %c0_i32_0 : i32, i32, i32
  }
  func.func @transform_6(%arg0: i32, %arg1: i32) -> (i32, i32, i32) {
    %c0_i32 = arith.constant 0 : i32
    %c0_i32_0 = arith.constant 0 : i32
    %c0_i32_1 = arith.constant 0 : i32
    return %arg1, %c0_i32, %c0_i32_0 : i32, i32, i32
  }
  func.func @transform_7(%arg0: i32, %arg1: i32) -> (i32, i32, i32) {
    %c0_i32 = arith.constant 0 : i32
    %c0_i32_0 = arith.constant 0 : i32
    %c0_i32_1 = arith.constant 0 : i32
    return %arg0, %c0_i32, %c0_i32_0 : i32, i32, i32
  }
}

</mosaic_0001>

<llo_original>
// kernel: tpu_custom_call.1
$region0: #{tpu_custom_call.1}
  #allocation0 [shape = 'u32[]', space=smem, size = 0x4, offset = 0x4, fixed_abs, tag = 'smem constant byte address 0x4 - core index']
  #allocation1 [shape = 'u32[144,128]{1,0:T(1,128)}', space=vmem, size = 0x12000, scoped, tag = 'internal scratch']
  #allocation2 [shape = 'f32[2,8,16]{2,1,0:T(8,128)}', space=vmem, size = 0x2000, scoped, tag = 'scratch operand']
  %s0 = inlined_call_operand.vmem [shape: f32[2,8,16], index: 0, kind: input, shape index: {}]
  %s1 = inlined_call_operand.vmem [shape: f32[2,8,16], index: 1, kind: input, shape index: {}]
  %s2 = inlined_call_operand.vmem [shape: f32[2,8,16], index: 2, kind: input, shape index: {}]
  %s3 = inlined_call_operand.vmem [shape: f32[4,16,8], index: 3, kind: input, shape index: {}]
  %s4 = inlined_call_operand.vmem [shape: f32[4,16,8], index: 4, kind: input, shape index: {}]
  %s5 = inlined_call_operand.vmem [shape: f32[4,16,8], index: 5, kind: input, shape index: {}]
  %s6 = inlined_call_operand.vmem [shape: f32[4,8,16], index: 6, kind: input, shape index: {}]
  %s7 = inlined_call_operand.hbm [shape: f32[2,8,16], index: 7, kind: output, shape index: {}]
  %s8 = sld [smem:[#allocation0]]
  $region69: #{tpu_custom_call.1} parent=0
    _
  %s10 = ssub.s32 1, %s8
  %s11 = scalar_select 0, %s10, %s8
  $region1: #{tpu_custom_call.1} parent=0
    #allocation3 [shape = 'u8[8192]{0}', space=vmem, size = 0x2000, scoped, tag = 'output window, operand 0, single buffered']
    #allocation4 [shape = 's32[2]{0}', space=sflag, size = 0x8, scoped, tag = 'scoped memory for tpu_custom_call.1']
    %12 = vsyncpa [#allocation4], 0
    loop: start=0, step=1, limit=6
    $region2: #{tpu_custom_call.1} parent=1 // loop_pre_header
      _
    $region3: #{tpu_custom_call.1} parent=1 // loop_header
      %s14 = sphi 0, %s18
      %p15 = scmp.ge.s32.totalorder %s14, 6
      %s21 = sphi 0, %s33
      %s22 = sphi 0, %s29
      %s23 = sphi 0, %s21
      %s24 = sphi 0, %s22
      %s25 = sphi 0, %s23
      %s26 = sphi 0, %s24
      %s36 = sphi 0, %s38
      %s39 = sphi 0, %s36
      %s40 = sphi 0, %s39
      %s56 = sphi 0, %s40
      %s62 = sphi 0, %s64
      %s65 = sphi 0, %s62
      %s66 = sphi 0, %s65
      %s82 = sphi 0, %s66
      %s88 = sphi 0, %s90
      %s91 = sphi 0, %s88
      %s92 = sphi 0, %s91
      %s108 = sphi 0, %s92
      %s114 = sphi 0, %s116
      %s117 = sphi 0, %s114
      %s118 = sphi 0, %s117
      %s134 = sphi 0, %s118
      %s140 = sphi 0, %s142
      %s143 = sphi 0, %s140
      %s144 = sphi 0, %s143
      %s160 = sphi 0, %s144
      %s166 = sphi 0, %s168
      %s169 = sphi 0, %s166
      %s170 = sphi 0, %s169
      %s186 = sphi 0, %s170
      %s192 = sphi 0, %s194
      %s195 = sphi 0, %s192
      %s196 = sphi 0, %s195
      %s212 = sphi 0, %s196
      %s218 = sphi 0, %s220
      %s221 = sphi 0, %s218
      %s222 = sphi 0, %s221
      %s238 = sphi 0, %s222
    $region4: #{tpu_custom_call.1} parent=1 // loop_header_branch
      %17 = sbr.rel (%p15) target = $region8
    $region5: #{tpu_custom_call.1} parent=1 // loop_body
      %s19 = ssub.s32 %s14, 1
      %s20 = ssub.s32 %s14, 2
      %s27 = sadd.s32 1, %s22
      %p28 = scmp.ge.s32.totalorder %s27, 4
      %s29 = scalar_select %p28, 0, %s27
      %s30 = sadd.s32 1, %s21
      %s31 = scalar_select %p28, %s30, %s21
      %p32 = scmp.ge.s32.totalorder %s31, 1
      %s33 = scalar_select %p32, 0, %s31
      %s34 = ssub.s32 %s21, %s33
      %p35 = scmp.eq.s32.totalorder %s34, 0
      %s37 = sadd.s32 %s36, 1
      %s38 = scalar_select %p35, %s36, %s37
      %p41 = pneg %p35
      %p42 = scmp.eq.s32.totalorder %s14, 3
      %p43 = por %p41, %p42
      %p44 = scmp.ne.s32.totalorder %s36, %s39
      %p45 = scmp.eq.s32.totalorder %s14, 0
      %p46 = por %p44, %p45
      %p47 = scmp.ne.s32.totalorder %s36, %s39
      %p48 = scmp.eq.s32.totalorder %s19, 3
      %p49 = por %p47, %p48
      %p50 = scmp.ne.s32.totalorder %s39, %s40
      %p51 = scmp.eq.s32.totalorder %s19, 0
      %p52 = por %p50, %p51
      %p53 = scmp.ne.s32.totalorder %s39, %s40
      %p54 = scmp.eq.s32.totalorder %s20, 3
      %p55 = por %p53, %p54
      %p57 = scmp.ne.s32.totalorder %s40, %s56
      %p58 = scmp.eq.s32.totalorder %s20, 0
      %p59 = por %p57, %p58
      %s60 = ssub.s32 %s21, %s33
      %p61 = scmp.eq.s32.totalorder %s60, 0
      %s63 = sadd.s32 %s62, 1
      %s64 = scalar_select %p61, %s62, %s63
      %p67 = pneg %p61
      %p68 = scmp.eq.s32.totalorder %s14, 3
      %p69 = por %p67, %p68
      %p70 = scmp.ne.s32.totalorder %s62, %s65
      %p71 = scmp.eq.s32.totalorder %s14, 0
      %p72 = por %p70, %p71
      %p73 = scmp.ne.s32.totalorder %s62, %s65
      %p74 = scmp.eq.s32.totalorder %s19, 3
      %p75 = por %p73, %p74
      %p76 = scmp.ne.s32.totalorder %s65, %s66
      %p77 = scmp.eq.s32.totalorder %s19, 0
      %p78 = por %p76, %p77
      %p79 = scmp.ne.s32.totalorder %s65, %s66
      %p80 = scmp.eq.s32.totalorder %s20, 3
      %p81 = por %p79, %p80
      %p83 = scmp.ne.s32.totalorder %s66, %s82
      %p84 = scmp.eq.s32.totalorder %s20, 0
      %p85 = por %p83, %p84
      %s86 = ssub.s32 %s21, %s33
      %p87 = scmp.eq.s32.totalorder %s86, 0
      %s89 = sadd.s32 %s88, 1
      %s90 = scalar_select %p87, %s88, %s89
      %p93 = pneg %p87
      %p94 = scmp.eq.s32.totalorder %s14, 3
      %p95 = por %p93, %p94
      %p96 = scmp.ne.s32.totalorder %s88, %s91
      %p97 = scmp.eq.s32.totalorder %s14, 0
      %p98 = por %p96, %p97
      %p99 = scmp.ne.s32.totalorder %s88, %s91
      %p100 = scmp.eq.s32.totalorder %s19, 3
      %p101 = por %p99, %p100
      %p102 = scmp.ne.s32.totalorder %s91, %s92
      %p103 = scmp.eq.s32.totalorder %s19, 0
      %p104 = por %p102, %p103
      %p105 = scmp.ne.s32.totalorder %s91, %s92
      %p106 = scmp.eq.s32.totalorder %s20, 3
      %p107 = por %p105, %p106
      %p109 = scmp.ne.s32.totalorder %s92, %s108
      %p110 = scmp.eq.s32.totalorder %s20, 0
      %p111 = por %p109, %p110
      %s112 = ssub.s32 %s22, %s29
      %p113 = scmp.eq.s32.totalorder %s112, 0
      %s115 = sadd.s32 %s114, 1
      %s116 = scalar_select %p113, %s114, %s115
      %p119 = pneg %p113
      %p120 = scmp.eq.s32.totalorder %s14, 3
      %p121 = por %p119, %p120
      %p122 = scmp.ne.s32.totalorder %s114, %s117
      %p123 = scmp.eq.s32.totalorder %s14, 0
      %p124 = por %p122, %p123
      %p125 = scmp.ne.s32.totalorder %s114, %s117
      %p126 = scmp.eq.s32.totalorder %s19, 3
      %p127 = por %p125, %p126
      %p128 = scmp.ne.s32.totalorder %s117, %s118
      %p129 = scmp.eq.s32.totalorder %s19, 0
      %p130 = por %p128, %p129
      %p131 = scmp.ne.s32.totalorder %s117, %s118
      %p132 = scmp.eq.s32.totalorder %s20, 3
      %p133 = por %p131, %p132
      %p135 = scmp.ne.s32.totalorder %s118, %s134
      %p136 = scmp.eq.s32.totalorder %s20, 0
      %p137 = por %p135, %p136
      %s138 = ssub.s32 %s22, %s29
      %p139 = scmp.eq.s32.totalorder %s138, 0
      %s141 = sadd.s32 %s140, 1
      %s142 = scalar_select %p139, %s140, %s141
      %p145 = pneg %p139
      %p146 = scmp.eq.s32.totalorder %s14, 3
      %p147 = por %p145, %p146
      %p148 = scmp.ne.s32.totalorder %s140, %s143
      %p149 = scmp.eq.s32.totalorder %s14, 0
      %p150 = por %p148, %p149
      %p151 = scmp.ne.s32.totalorder %s140, %s143
      %p152 = scmp.eq.s32.totalorder %s19, 3
      %p153 = por %p151, %p152
      %p154 = scmp.ne.s32.totalorder %s143, %s144
      %p155 = scmp.eq.s32.totalorder %s19, 0
      %p156 = por %p154, %p155
      %p157 = scmp.ne.s32.totalorder %s143, %s144
      %p158 = scmp.eq.s32.totalorder %s20, 3
      %p159 = por %p157, %p158
      %p161 = scmp.ne.s32.totalorder %s144, %s160
      %p162 = scmp.eq.s32.totalorder %s20, 0
      %p163 = por %p161, %p162
      %s164 = ssub.s32 %s22, %s29
      %p165 = scmp.eq.s32.totalorder %s164, 0
      %s167 = sadd.s32 %s166, 1
      %s168 = scalar_select %p165, %s166, %s167
      %p171 = pneg %p165
      %p172 = scmp.eq.s32.totalorder %s14, 3
      %p173 = por %p171, %p172
      %p174 = scmp.ne.s32.totalorder %s166, %s169
      %p175 = scmp.eq.s32.totalorder %s14, 0
      %p176 = por %p174, %p175
      %p177 = scmp.ne.s32.totalorder %s166, %s169
      %p178 = scmp.eq.s32.totalorder %s19, 3
      %p179 = por %p177, %p178
      %p180 = scmp.ne.s32.totalorder %s169, %s170
      %p181 = scmp.eq.s32.totalorder %s19, 0
      %p182 = por %p180, %p181
      %p183 = scmp.ne.s32.totalorder %s169, %s170
      %p184 = scmp.eq.s32.totalorder %s20, 3
      %p185 = por %p183, %p184
      %p187 = scmp.ne.s32.totalorder %s170, %s186
      %p188 = scmp.eq.s32.totalorder %s20, 0
      %p189 = por %p187, %p188
      %s190 = ssub.s32 %s22, %s29
      %p191 = scmp.eq.s32.totalorder %s190, 0
      %s193 = sadd.s32 %s192, 1
      %s194 = scalar_select %p191, %s192, %s193
      %p197 = pneg %p191
      %p198 = scmp.eq.s32.totalorder %s14, 3
      %p199 = por %p197, %p198
      %p200 = scmp.ne.s32.totalorder %s192, %s195
      %p201 = scmp.eq.s32.totalorder %s14, 0
      %p202 = por %p200, %p201
      %p203 = scmp.ne.s32.totalorder %s192, %s195
      %p204 = scmp.eq.s32.totalorder %s19, 3
      %p205 = por %p203, %p204
      %p206 = scmp.ne.s32.totalorder %s195, %s196
      %p207 = scmp.eq.s32.totalorder %s19, 0
      %p208 = por %p206, %p207
      %p209 = scmp.ne.s32.totalorder %s195, %s196
      %p210 = scmp.eq.s32.totalorder %s20, 3
      %p211 = por %p209, %p210
      %p213 = scmp.ne.s32.totalorder %s196, %s212
      %p214 = scmp.eq.s32.totalorder %s20, 0
      %p215 = por %p213, %p214
      %s216 = ssub.s32 %s21, %s33
      %p217 = scmp.eq.s32.totalorder %s216, 0
      %s219 = sadd.s32 %s218, 1
      %s220 = scalar_select %p217, %s218, %s219
      %p223 = pneg %p217
      %p224 = scmp.eq.s32.totalorder %s14, 3
      %p225 = por %p223, %p224
      %p226 = scmp.ne.s32.totalorder %s218, %s221
      %p227 = scmp.eq.s32.totalorder %s14, 0
      %p228 = por %p226, %p227
      %p229 = scmp.ne.s32.totalorder %s218, %s221
      %p230 = scmp.eq.s32.totalorder %s19, 3
      %p231 = por %p229, %p230
      %p232 = scmp.ne.s32.totalorder %s221, %s222
      %p233 = scmp.eq.s32.totalorder %s19, 0
      %p234 = por %p232, %p233
      %p235 = scmp.ne.s32.totalorder %s221, %s222
      %p236 = scmp.eq.s32.totalorder %s20, 3
      %p237 = por %p235, %p236
      %p239 = scmp.ne.s32.totalorder %s222, %s238
      %p240 = scmp.eq.s32.totalorder %s20, 0
      %p241 = por %p239, %p240
      %p242 = scmp.le.s32.totalorder 1, %s14
      %p243 = scmp.lt.s32.totalorder %s14, 5
      %p244 = pnand %p242, %p243
      %p245 = pneg %p244
      // Predicated region
      $region9: #{tpu_custom_call.1} parent=5 // pred_check
        _
      $region10: #{tpu_custom_call.1} parent=5 // pred_check_branch
        %247 = sbr.rel (%p244) target = $region12
      $region11: #{tpu_custom_call.1} parent=5 // pred_region
        %s248 = ssub.s32 %s14, 1
        // Predicated region
        $region13: #{tpu_custom_call.1} parent=11 // pred_check
          %p249 = pneg %p52
        $region14: #{tpu_custom_call.1} parent=11 // pred_check_branch
          %251 = sbr.rel (%p249) target = $region16
        $region15: #{tpu_custom_call.1} parent=11 // pred_region
          %s252 = smul.u32 2, %s23
          %p253 = scmp.lt.s32.totalorder %s252, 1
          %s254 = scalar_select %p253, %s252, 1
          %s255 = smul.addr %s254, 8
          %s256 = scalar_lea.vmem %s0, %s255
          %s257 = smul.u32 2, %s23
        $region16: #{tpu_custom_call.1} parent=11 // pred_fallthru
          _
        // Predicated region
        $region17: #{tpu_custom_call.1} parent=11 // pred_check
          %p258 = pneg %p78
        $region18: #{tpu_custom_call.1} parent=11 // pred_check_branch
          %260 = sbr.rel (%p258) target = $region20
        $region19: #{tpu_custom_call.1} parent=11 // pred_region
          %s261 = smul.u32 2, %s23
          %p262 = scmp.lt.s32.totalorder %s261, 1
          %s263 = scalar_select %p262, %s261, 1
          %s264 = smul.addr %s263, 8
          %s265 = scalar_lea.vmem %s1, %s264
          %s266 = smul.u32 2, %s23
        $region20: #{tpu_custom_call.1} parent=11 // pred_fallthru
          _
        // Predicated region
        $region21: #{tpu_custom_call.1} parent=11 // pred_check
          %p267 = pneg %p104
        $region22: #{tpu_custom_call.1} parent=11 // pred_check_branch
          %269 = sbr.rel (%p267) target = $region24
        $region23: #{tpu_custom_call.1} parent=11 // pred_region
          %s270 = smul.u32 2, %s23
          %p271 = scmp.lt.s32.totalorder %s270, 1
          %s272 = scalar_select %p271, %s270, 1
          %s273 = smul.addr %s272, 8
          %s274 = scalar_lea.vmem %s2, %s273
          %s275 = smul.u32 2, %s23
        $region24: #{tpu_custom_call.1} parent=11 // pred_fallthru
          _
      $region12: #{tpu_custom_call.1} parent=5 // pred_fallthru
        _
      %p276 = scmp.lt.s32.totalorder %s14, 4
      // Predicated region
      $region25: #{tpu_custom_call.1} parent=5 // pred_check
        %p277 = pneg %p276
      $region26: #{tpu_custom_call.1} parent=5 // pred_check_branch
        %279 = sbr.rel (%p277) target = $region28
      $region27: #{tpu_custom_call.1} parent=5 // pred_region
        // Predicated region
        $region29: #{tpu_custom_call.1} parent=27 // pred_check
          %p280 = pneg %p124
        $region30: #{tpu_custom_call.1} parent=27 // pred_check_branch
          %282 = sbr.rel (%p280) target = $region32
        $region31: #{tpu_custom_call.1} parent=27 // pred_region
          %p283 = scmp.lt.s32.totalorder %s22, 3
          %s284 = scalar_select %p283, %s22, 3
          %s285 = smul.addr %s284, 2
          %s286 = smul.addr %s285, 8
          %s287 = scalar_lea.vmem %s3, %s286
        $region32: #{tpu_custom_call.1} parent=27 // pred_fallthru
          _
        // Predicated region
        $region33: #{tpu_custom_call.1} parent=27 // pred_check
          %p288 = pneg %p150
        $region34: #{tpu_custom_call.1} parent=27 // pred_check_branch
          %290 = sbr.rel (%p288) target = $region36
        $region35: #{tpu_custom_call.1} parent=27 // pred_region
          %p291 = scmp.lt.s32.totalorder %s22, 3
          %s292 = scalar_select %p291, %s22, 3
          %s293 = smul.addr %s292, 2
          %s294 = smul.addr %s293, 8
          %s295 = scalar_lea.vmem %s4, %s294
        $region36: #{tpu_custom_call.1} parent=27 // pred_fallthru
          _
        // Predicated region
        $region37: #{tpu_custom_call.1} parent=27 // pred_check
          %p296 = pneg %p176
        $region38: #{tpu_custom_call.1} parent=27 // pred_check_branch
          %298 = sbr.rel (%p296) target = $region40
        $region39: #{tpu_custom_call.1} parent=27 // pred_region
          %p299 = scmp.lt.s32.totalorder %s22, 3
          %s300 = scalar_select %p299, %s22, 3
          %s301 = smul.addr %s300, 2
          %s302 = smul.addr %s301, 8
          %s303 = scalar_lea.vmem %s5, %s302
        $region40: #{tpu_custom_call.1} parent=27 // pred_fallthru
          _
        // Predicated region
        $region41: #{tpu_custom_call.1} parent=27 // pred_check
          %p304 = pneg %p202
        $region42: #{tpu_custom_call.1} parent=27 // pred_check_branch
          %306 = sbr.rel (%p304) target = $region44
        $region43: #{tpu_custom_call.1} parent=27 // pred_region
          %p307 = scmp.lt.s32.totalorder %s22, 3
          %s308 = scalar_select %p307, %s22, 3
          %s309 = smul.addr %s308, 8
          %s310 = scalar_lea.vmem %s6, %s309
        $region44: #{tpu_custom_call.1} parent=27 // pred_fallthru
          _
      $region28: #{tpu_custom_call.1} parent=5 // pred_fallthru
        _
      %p311 = scmp.le.s32.totalorder 1, %s14
      %p312 = scmp.lt.s32.totalorder %s14, 5
      %p313 = pnand %p311, %p312
      %p314 = pneg %p313
      // Predicated region
      $region45: #{tpu_custom_call.1} parent=5 // pred_check
        _
      $region46: #{tpu_custom_call.1} parent=5 // pred_check_branch
        %316 = sbr.rel (%p313) target = $region48
      $region47: #{tpu_custom_call.1} parent=5 // pred_region
        %s317 = ssub.s32 %s14, 1
        %s318 = smul.u32 2, %s23
        %p319 = scmp.lt.s32.totalorder %s318, 1
        %s320 = scalar_select %p319, %s318, 1
        %s321 = smul.addr %s320, 8
        %s322 = scalar_lea.vmem %s0, %s321
        %p323 = pneg %p52
        %p324 = pneg %p49
        %s325 = smul.u32 2, %s23
        %p326 = scmp.lt.s32.totalorder %s325, 1
        %s327 = scalar_select %p326, %s325, 1
        %s328 = smul.addr %s327, 8
        %s329 = scalar_lea.vmem %s1, %s328
        %p330 = pneg %p78
        %p331 = pneg %p75
        %s332 = smul.u32 2, %s23
        %p333 = scmp.lt.s32.totalorder %s332, 1
        %s334 = scalar_select %p333, %s332, 1
        %s335 = smul.addr %s334, 8
        %s336 = scalar_lea.vmem %s2, %s335
        %p337 = pneg %p104
        %p338 = pneg %p101
        %p339 = scmp.lt.s32.totalorder %s24, 3
        %s340 = scalar_select %p339, %s24, 3
        %s341 = smul.addr %s340, 2
        %s342 = smul.addr %s341, 8
        %s343 = scalar_lea.vmem %s3, %s342
        %p344 = pneg %p130
        %p345 = pneg %p127
        %p346 = scmp.lt.s32.totalorder %s24, 3
        %s347 = scalar_select %p346, %s24, 3
        %s348 = smul.addr %s347, 2
        %s349 = smul.addr %s348, 8
        %s350 = scalar_lea.vmem %s4, %s349
        %p351 = pneg %p156
        %p352 = pneg %p153
        %p353 = scmp.lt.s32.totalorder %s24, 3
        %s354 = scalar_select %p353, %s24, 3
        %s355 = smul.addr %s354, 2
        %s356 = smul.addr %s355, 8
        %s357 = scalar_lea.vmem %s5, %s356
        %p358 = pneg %p182
        %p359 = pneg %p179
        %p360 = scmp.lt.s32.totalorder %s24, 3
        %s361 = scalar_select %p360, %s24, 3
        %s362 = smul.addr %s361, 8
        %s363 = scalar_lea.vmem %s6, %s362
        %p364 = pneg %p208
        %p365 = pneg %p205
        %p366 = pneg %p234
        %p367 = pneg %p231
        %s368 = smul.u32 2, %s23
        %p369 = scmp.lt.s32.totalorder %s368, 1
        %s370 = scalar_select %p369, %s368, 1
        %s371 = smul.addr %s370, 8
        %s372 = scalar_lea.vmem %s0, %s371
        %s373 = smul.u32 2, %s23
        %s374 = smul.u32 2, %s23
        %p375 = scmp.lt.s32.totalorder %s374, 1
        %s376 = scalar_select %p375, %s374, 1
        %s377 = smul.addr %s376, 8
        %s378 = scalar_lea.vmem %s1, %s377
        %s379 = smul.u32 2, %s23
        %s380 = smul.u32 2, %s23
        %p381 = scmp.lt.s32.totalorder %s380, 1
        %s382 = scalar_select %p381, %s380, 1
        %s383 = smul.addr %s382, 8
        %s384 = scalar_lea.vmem %s2, %s383
        %s385 = smul.u32 2, %s23
        %p386 = scmp.lt.s32.totalorder %s24, 3
        %s387 = scalar_select %p386, %s24, 3
        %s388 = smul.addr %s387, 2
        %s389 = smul.addr %s388, 8
        %s390 = scalar_lea.vmem %s3, %s389
        %p391 = scmp.lt.s32.totalorder %s24, 3
        %s392 = scalar_select %p391, %s24, 3
        %s393 = smul.addr %s392, 2
        %s394 = smul.addr %s393, 8
        %s395 = scalar_lea.vmem %s4, %s394
        %p396 = scmp.lt.s32.totalorder %s24, 3
        %s397 = scalar_select %p396, %s24, 3
        %s398 = smul.addr %s397, 2
        %s399 = smul.addr %s398, 8
        %s400 = scalar_lea.vmem %s5, %s399
        %p401 = scmp.lt.s32.totalorder %s24, 3
        %s402 = scalar_select %p401, %s24, 3
        %s403 = smul.addr %s402, 8
        %s404 = scalar_lea.vmem %s6, %s403
        %s405 = smul.u32 2, %s23
        %p407 = scmp.eq.s32.totalorder %s24, 0
        // Predicated region
        $region49: #{tpu_custom_call.1} parent=47 // pred_check
          %p408 = pneg %p407
        $region50: #{tpu_custom_call.1} parent=47 // pred_check_branch
          %410 = sbr.rel (%p408) target = $region52
        $region51: #{tpu_custom_call.1} parent=47 // pred_region
          %vm411 = vcmask 130048
          %412 = vst.msk [vmem:[#allocation2] sm:$0xff] %vm411, 0.0
          %413 = vst.msk [vmem:[#allocation2 + $0x8] sm:$0xff] %vm411, 0.0
        $region52: #{tpu_custom_call.1} parent=47 // pred_fallthru
          _
        %v414 = vld [vmem:[%s372] sm:$0xff]
        %v415 = vld [vmem:[%s372 + $0x8] sm:$0xff]
        %v416 = vpack.c.bf16 %v414, %v414
        %v417 = vpack.c.bf16 %v415, %v415
        %v418 = vld [vmem:[%s378] sm:$0xff]
        %v419 = vld [vmem:[%s378 + $0x8] sm:$0xff]
        %v420 = vpack.c.bf16 %v418, %v418
        %v421 = vpack.c.bf16 %v419, %v419
        %v422 = vld [vmem:[%s384] sm:$0xff]
        %v423 = vld [vmem:[%s384 + $0x8] sm:$0xff]
        %v424 = vpack.c.bf16 %v422, %v422
        %v425 = vpack.c.bf16 %v423, %v423
        %v426 = vld [vmem:[%s390] sm:$0xff]
        %v427 = vld [vmem:[%s390 + $0x8] sm:$0xff]
        %v428 = vpack.c.bf16 %v427, %v426
        %v429 = vld [vmem:[%s395] sm:$0xff]
        %v430 = vld [vmem:[%s395 + $0x8] sm:$0xff]
        %v431 = vpack.c.bf16 %v430, %v429
        %v432 = vld [vmem:[%s400] sm:$0xff]
        %v433 = vld [vmem:[%s400 + $0x8] sm:$0xff]
        %v434 = vpack.c.bf16 %v433, %v432
        %v437 = vunpack.c.l.b16 %v416
        %v438 = vunpack.c.l.b16 %v417
        %v439 = vpack.c.b16 %v438, %v437
        %vm440 = vcmask 130048
        %v442 = vsel %vm440, %v439, 0
        %444 = vmatprep.subr.bf16.mxu0 0
        %445 = vmatpush1.bf16.msra.mxu0 0
        %446 = vmatprep.subr.bf16.mxu0 0
        %447 = vmatpush1.bf16.msra.mxu0 0
        %448 = vmatprep.subr.bf16.mxu0 0
        %449 = vmatpush1.bf16.msra.mxu0 0
        %450 = vmatprep.subr.bf16.mxu0 0
        %451 = vmatpush1.bf16.msra.mxu0 0
        %452 = vmatprep.subr.bf16.mxu0 0
        %453 = vmatpush1.bf16.msra.mxu0 0
        %454 = vmatprep.subr.bf16.mxu0 0
        %455 = vmatpush1.bf16.msra.mxu0 0
        %456 = vmatprep.subr.bf16.mxu0 0
        %457 = vmatpush1.bf16.msra.mxu0 0
        %458 = vmatprep.subr.bf16.mxu0 0
        %459 = vmatpush1.bf16.msra.mxu0 %v428
        %460 = vmatprep.subr.bf16.mxu0 0
        %461 = vmatpush2.bf16.msra.mxu0 0
        %462 = vmatprep.subr.bf16.mxu0 0
        %463 = vmatpush2.bf16.msra.mxu0 0
        %464 = vmatprep.subr.bf16.mxu0 0
        %465 = vmatpush2.bf16.msra.mxu0 0
        %466 = vmatprep.subr.bf16.mxu0 0
        %467 = vmatpush2.bf16.msra.mxu0 0
        %468 = vmatprep.subr.bf16.mxu0 0
        %469 = vmatpush2.bf16.msra.mxu0 0
        %470 = vmatprep.subr.bf16.mxu0 0
        %471 = vmatpush2.bf16.msra.mxu0 0
        %472 = vmatprep.subr.bf16.mxu0 0
        %473 = vmatpush2.bf16.msra.mxu0 0
        %474 = vmatprep.subr.bf16.mxu0 0
        %475 = vmatpush2.bf16.msra.mxu0 0
        %476 = vmatprep.mubr.bf16.mxu0 0
        %477 = vmatmul.mubr.bf16.gmra.mxu0 %v442
        %v478 = vpop.f32.mrf.mxu0
        %v479 = vadd.f32 0.0, %v478
        %v480 = vpop.f32.mrf.mxu0
        %v481 = vpop.f32.mrf.mxu0
        %v482 = vadd.f32 0.0, %v481
        %v483 = vpop.f32.mrf.mxu0
        %484 = vdwg.mxu0
        %v487 = vunpack.c.l.b16 %v420
        %v488 = vunpack.c.l.b16 %v421
        %v489 = vpack.c.b16 %v488, %v487
        %v491 = vsel %vm440, %v489, 0
        %493 = vmatprep.subr.bf16.mxu0 0
        %494 = vmatpush1.bf16.msra.mxu0 0
        %495 = vmatprep.subr.bf16.mxu0 0
        %496 = vmatpush1.bf16.msra.mxu0 0
        %497 = vmatprep.subr.bf16.mxu0 0
        %498 = vmatpush1.bf16.msra.mxu0 0
        %499 = vmatprep.subr.bf16.mxu0 0
        %500 = vmatpush1.bf16.msra.mxu0 0
        %501 = vmatprep.subr.bf16.mxu0 0
        %502 = vmatpush1.bf16.msra.mxu0 0
        %503 = vmatprep.subr.bf16.mxu0 0
        %504 = vmatpush1.bf16.msra.mxu0 0
        %505 = vmatprep.subr.bf16.mxu0 0
        %506 = vmatpush1.bf16.msra.mxu0 0
        %507 = vmatprep.subr.bf16.mxu0 0
        %508 = vmatpush1.bf16.msra.mxu0 %v431
        %509 = vmatprep.subr.bf16.mxu0 0
        %510 = vmatpush2.bf16.msra.mxu0 0
        %511 = vmatprep.subr.bf16.mxu0 0
        %512 = vmatpush2.bf16.msra.mxu0 0
        %513 = vmatprep.subr.bf16.mxu0 0
        %514 = vmatpush2.bf16.msra.mxu0 0
        %515 = vmatprep.subr.bf16.mxu0 0
        %516 = vmatpush2.bf16.msra.mxu0 0
        %517 = vmatprep.subr.bf16.mxu0 0
        %518 = vmatpush2.bf16.msra.mxu0 0
        %519 = vmatprep.subr.bf16.mxu0 0
        %520 = vmatpush2.bf16.msra.mxu0 0
        %521 = vmatprep.subr.bf16.mxu0 0
        %522 = vmatpush2.bf16.msra.mxu0 0
        %523 = vmatprep.subr.bf16.mxu0 0
        %524 = vmatpush2.bf16.msra.mxu0 0
        %525 = vmatprep.mubr.bf16.mxu0 0
        %526 = vmatmul.mubr.bf16.gmra.mxu0 %v491
        %v527 = vpop.f32.mrf.mxu0
        %v528 = vadd.f32 0.0, %v527
        %v529 = vpop.f32.mrf.mxu0
        %v530 = vpop.f32.mrf.mxu0
        %v531 = vadd.f32 0.0, %v530
        %v532 = vpop.f32.mrf.mxu0
        %533 = vdwg.mxu0
        %v536 = vunpack.c.l.b16 %v424
        %v537 = vunpack.c.l.b16 %v425
        %v538 = vpack.c.b16 %v537, %v536
        %v540 = vsel %vm440, %v538, 0
        %542 = vmatprep.subr.bf16.mxu0 0
        %543 = vmatpush1.bf16.msra.mxu0 0
        %544 = vmatprep.subr.bf16.mxu0 0
        %545 = vmatpush1.bf16.msra.mxu0 0
        %546 = vmatprep.subr.bf16.mxu0 0
        %547 = vmatpush1.bf16.msra.mxu0 0
        %548 = vmatprep.subr.bf16.mxu0 0
        %549 = vmatpush1.bf16.msra.mxu0 0
        %550 = vmatprep.subr.bf16.mxu0 0
        %551 = vmatpush1.bf16.msra.mxu0 0
        %552 = vmatprep.subr.bf16.mxu0 0
        %553 = vmatpush1.bf16.msra.mxu0 0
        %554 = vmatprep.subr.bf16.mxu0 0
        %555 = vmatpush1.bf16.msra.mxu0 0
        %556 = vmatprep.subr.bf16.mxu0 0
        %557 = vmatpush1.bf16.msra.mxu0 %v434
        %558 = vmatprep.subr.bf16.mxu0 0
        %559 = vmatpush2.bf16.msra.mxu0 0
        %560 = vmatprep.subr.bf16.mxu0 0
        %561 = vmatpush2.bf16.msra.mxu0 0
        %562 = vmatprep.subr.bf16.mxu0 0
        %563 = vmatpush2.bf16.msra.mxu0 0
        %564 = vmatprep.subr.bf16.mxu0 0
        %565 = vmatpush2.bf16.msra.mxu0 0
        %566 = vmatprep.subr.bf16.mxu0 0
        %567 = vmatpush2.bf16.msra.mxu0 0
        %568 = vmatprep.subr.bf16.mxu0 0
        %569 = vmatpush2.bf16.msra.mxu0 0
        %570 = vmatprep.subr.bf16.mxu0 0
        %571 = vmatpush2.bf16.msra.mxu0 0
        %572 = vmatprep.subr.bf16.mxu0 0
        %573 = vmatpush2.bf16.msra.mxu0 0
        %574 = vmatprep.mubr.bf16.mxu0 0
        %575 = vmatmul.mubr.bf16.gmra.mxu0 %v540
        %v576 = vpop.f32.mrf.mxu0
        %v577 = vadd.f32 0.0, %v576
        %v578 = vpop.f32.mrf.mxu0
        %v579 = vpop.f32.mrf.mxu0
        %v580 = vadd.f32 0.0, %v579
        %v581 = vpop.f32.mrf.mxu0
        %582 = vdwg.mxu0
        %v583 = vmul.f32 %v577, 0.35355338
        %v584 = vmul.f32 %v580, 0.35355338
        %v585 = vpack.c.bf16 %v479, %v479
        %v586 = vpack.c.bf16 %v482, %v482
        %v587 = vpack.c.bf16 %v528, %v528
        %v588 = vpack.c.bf16 %v531, %v531
        %v589 = vpack.c.bf16 %v583, %v583
        %v590 = vpack.c.bf16 %v584, %v584
        %vm591 = vcmask 64512
        %v593 = vsel %vm591, %v589, 0
        %v596 = vsel %vm591, %v585, 0
        %598 = vmatprep.subr.bf16.mxu0 0
        %599 = vmatpush1.bf16.xpose.msra.mxu0 0
        %600 = vmatprep.subr.bf16.mxu0 0
        %601 = vmatpush1.bf16.xpose.msra.mxu0 0
        %602 = vmatprep.subr.bf16.mxu0 0
        %603 = vmatpush1.bf16.xpose.msra.mxu0 0
        %604 = vmatprep.subr.bf16.mxu0 0
        %605 = vmatpush1.bf16.xpose.msra.mxu0 0
        %606 = vmatprep.subr.bf16.mxu0 0
        %607 = vmatpush1.bf16.xpose.msra.mxu0 0
        %608 = vmatprep.subr.bf16.mxu0 0
        %609 = vmatpush1.bf16.xpose.msra.mxu0 0
        %610 = vmatprep.subr.bf16.mxu0 0
        %611 = vmatpush1.bf16.xpose.msra.mxu0 0
        %612 = vmatprep.subr.bf16.mxu0 0
        %613 = vmatpush1.bf16.xpose.msra.mxu0 %v596
        %614 = vmatprep.subr.bf16.mxu0 0
        %615 = vmatpush2.bf16.xpose.msra.mxu0 0
        %616 = vmatprep.subr.bf16.mxu0 0
        %617 = vmatpush2.bf16.xpose.msra.mxu0 0
        %618 = vmatprep.subr.bf16.mxu0 0
        %619 = vmatpush2.bf16.xpose.msra.mxu0 0
        %620 = vmatprep.subr.bf16.mxu0 0
        %621 = vmatpush2.bf16.xpose.msra.mxu0 0
        %622 = vmatprep.subr.bf16.mxu0 0
        %623 = vmatpush2.bf16.xpose.msra.mxu0 0
        %624 = vmatprep.subr.bf16.mxu0 0
        %625 = vmatpush2.bf16.xpose.msra.mxu0 0
        %626 = vmatprep.subr.bf16.mxu0 0
        %627 = vmatpush2.bf16.xpose.msra.mxu0 0
        %628 = vmatprep.subr.bf16.mxu0 0
        %629 = vmatpush2.bf16.xpose.msra.mxu0 0
        %630 = vmatprep.mubr.bf16.mxu0 0
        %631 = vmatmul.mubr.bf16.gmra.mxu0 %v593
        %v632 = vpop.f32.mrf.mxu0
        %v633 = vadd.f32 0.0, %v632
        %v634 = vpop.f32.mrf.mxu0
        %v635 = vpop.f32.mrf.mxu0
        %v636 = vpop.f32.mrf.mxu0
        %637 = vdwg.mxu0
        %v639 = vsel %vm591, %v590, 0
        %v642 = vsel %vm591, %v586, 0
        %644 = vmatprep.subr.bf16.mxu0 0
        %645 = vmatpush1.bf16.xpose.msra.mxu0 0
        %646 = vmatprep.subr.bf16.mxu0 0
        %647 = vmatpush1.bf16.xpose.msra.mxu0 0
        %648 = vmatprep.subr.bf16.mxu0 0
        %649 = vmatpush1.bf16.xpose.msra.mxu0 0
        %650 = vmatprep.subr.bf16.mxu0 0
        %651 = vmatpush1.bf16.xpose.msra.mxu0 0
        %652 = vmatprep.subr.bf16.mxu0 0
        %653 = vmatpush1.bf16.xpose.msra.mxu0 0
        %654 = vmatprep.subr.bf16.mxu0 0
        %655 = vmatpush1.bf16.xpose.msra.mxu0 0
        %656 = vmatprep.subr.bf16.mxu0 0
        %657 = vmatpush1.bf16.xpose.msra.mxu0 0
        %658 = vmatprep.subr.bf16.mxu0 0
        %659 = vmatpush1.bf16.xpose.msra.mxu0 %v642
        %660 = vmatprep.subr.bf16.mxu0 0
        %661 = vmatpush2.bf16.xpose.msra.mxu0 0
        %662 = vmatprep.subr.bf16.mxu0 0
        %663 = vmatpush2.bf16.xpose.msra.mxu0 0
        %664 = vmatprep.subr.bf16.mxu0 0
        %665 = vmatpush2.bf16.xpose.msra.mxu0 0
        %666 = vmatprep.subr.bf16.mxu0 0
        %667 = vmatpush2.bf16.xpose.msra.mxu0 0
        %668 = vmatprep.subr.bf16.mxu0 0
        %669 = vmatpush2.bf16.xpose.msra.mxu0 0
        %670 = vmatprep.subr.bf16.mxu0 0
        %671 = vmatpush2.bf16.xpose.msra.mxu0 0
        %672 = vmatprep.subr.bf16.mxu0 0
        %673 = vmatpush2.bf16.xpose.msra.mxu0 0
        %674 = vmatprep.subr.bf16.mxu0 0
        %675 = vmatpush2.bf16.xpose.msra.mxu0 0
        %676 = vmatprep.mubr.bf16.mxu0 0
        %677 = vmatmul.mubr.bf16.gmra.mxu0 %v639
        %v678 = vpop.f32.mrf.mxu0
        %v679 = vadd.f32 0.0, %v678
        %v680 = vpop.f32.mrf.mxu0
        %v681 = vpop.f32.mrf.mxu0
        %v682 = vpop.f32.mrf.mxu0
        %683 = vdwg.mxu0
        %v684 = vsel %vm591, %v633, -inf
        %685 = vmax.xlane.f32.xlu0 %v684
        %v686 = vpop.xlane.xlu0 %685
        %v687 = vsel %vm591, %v679, -inf
        %688 = vmax.xlane.f32.xlu0 %v687
        %v689 = vpop.xlane.xlu0 %688
        %v690 = vsub.f32 %v633, %v686
        %v691 = vsub.f32 %v679, %v689
        %v692 = vmul.f32 %v690, 1.442695
        %v693 = vpow.pop %v692
        %v694 = vmul.f32 %v691, 1.442695
        %v695 = vpow.pop %v694
        %v696 = vsel %vm591, %v693, 0.0
        %697 = vadd.xlane.f32.xlu0 %v696
        %v698 = vpop.xlane.xlu0 %697
        %v699 = vsel %vm591, %v695, 0.0
        %700 = vadd.xlane.f32.xlu0 %v699
        %v701 = vpop.xlane.xlu0 %700
        %v702 = vrcp.pop %v698
        %v703 = vrcp.pop %v701
        %v704 = vmul.f32 %v693, %v702
        %v705 = vmul.f32 %v695, %v703
        %v706 = vpack.c.bf16 %v704, %v704
        %v707 = vpack.c.bf16 %v705, %v705
        %v709 = vsel %vm591, %v706, 0
        %vm711 = vcmask 1043456
        %v713 = vsel %vm711, %v587, 0
        %715 = vmatprep.subr.bf16.mxu0 0
        %716 = vmatpush1.bf16.msra.mxu0 0
        %717 = vmatprep.subr.bf16.mxu0 0
        %718 = vmatpush1.bf16.msra.mxu0 0
        %719 = vmatprep.subr.bf16.mxu0 0
        %720 = vmatpush1.bf16.msra.mxu0 0
        %721 = vmatprep.subr.bf16.mxu0 0
        %722 = vmatpush1.bf16.msra.mxu0 0
        %723 = vmatprep.subr.bf16.mxu0 0
        %724 = vmatpush1.bf16.msra.mxu0 0
        %725 = vmatprep.subr.bf16.mxu0 0
        %726 = vmatpush1.bf16.msra.mxu0 0
        %727 = vmatprep.subr.bf16.mxu0 0
        %728 = vmatpush1.bf16.msra.mxu0 0
        %729 = vmatprep.subr.bf16.mxu0 0
        %730 = vmatpush1.bf16.msra.mxu0 %v713
        %731 = vmatprep.subr.bf16.mxu0 0
        %732 = vmatpush2.bf16.msra.mxu0 0
        %733 = vmatprep.subr.bf16.mxu0 0
        %734 = vmatpush2.bf16.msra.mxu0 0
        %735 = vmatprep.subr.bf16.mxu0 0
        %736 = vmatpush2.bf16.msra.mxu0 0
        %737 = vmatprep.subr.bf16.mxu0 0
        %738 = vmatpush2.bf16.msra.mxu0 0
        %739 = vmatprep.subr.bf16.mxu0 0
        %740 = vmatpush2.bf16.msra.mxu0 0
        %741 = vmatprep.subr.bf16.mxu0 0
        %742 = vmatpush2.bf16.msra.mxu0 0
        %743 = vmatprep.subr.bf16.mxu0 0
        %744 = vmatpush2.bf16.msra.mxu0 0
        %745 = vmatprep.subr.bf16.mxu0 0
        %746 = vmatpush2.bf16.msra.mxu0 0
        %747 = vmatprep.mubr.bf16.mxu0 0
        %748 = vmatmul.mubr.bf16.gmra.mxu0 %v709
        %v749 = vpop.f32.mrf.mxu0
        %v750 = vadd.f32 0.0, %v749
        %v751 = vpop.f32.mrf.mxu0
        %v752 = vpop.f32.mrf.mxu0
        %v753 = vpop.f32.mrf.mxu0
        %754 = vdwg.mxu0
        %v756 = vsel %vm591, %v707, 0
        %v759 = vsel %vm711, %v588, 0
        %761 = vmatprep.subr.bf16.mxu0 0
        %762 = vmatpush1.bf16.msra.mxu0 0
        %763 = vmatprep.subr.bf16.mxu0 0
        %764 = vmatpush1.bf16.msra.mxu0 0
        %765 = vmatprep.subr.bf16.mxu0 0
        %766 = vmatpush1.bf16.msra.mxu0 0
        %767 = vmatprep.subr.bf16.mxu0 0
        %768 = vmatpush1.bf16.msra.mxu0 0
        %769 = vmatprep.subr.bf16.mxu0 0
        %770 = vmatpush1.bf16.msra.mxu0 0
        %771 = vmatprep.subr.bf16.mxu0 0
        %772 = vmatpush1.bf16.msra.mxu0 0
        %773 = vmatprep.subr.bf16.mxu0 0
        %774 = vmatpush1.bf16.msra.mxu0 0
        %775 = vmatprep.subr.bf16.mxu0 0
        %776 = vmatpush1.bf16.msra.mxu0 %v759
        %777 = vmatprep.subr.bf16.mxu0 0
        %778 = vmatpush2.bf16.msra.mxu0 0
        %779 = vmatprep.subr.bf16.mxu0 0
        %780 = vmatpush2.bf16.msra.mxu0 0
        %781 = vmatprep.subr.bf16.mxu0 0
        %782 = vmatpush2.bf16.msra.mxu0 0
        %783 = vmatprep.subr.bf16.mxu0 0
        %784 = vmatpush2.bf16.msra.mxu0 0
        %785 = vmatprep.subr.bf16.mxu0 0
        %786 = vmatpush2.bf16.msra.mxu0 0
        %787 = vmatprep.subr.bf16.mxu0 0
        %788 = vmatpush2.bf16.msra.mxu0 0
        %789 = vmatprep.subr.bf16.mxu0 0
        %790 = vmatpush2.bf16.msra.mxu0 0
        %791 = vmatprep.subr.bf16.mxu0 0
        %792 = vmatpush2.bf16.msra.mxu0 0
        %793 = vmatprep.mubr.bf16.mxu0 0
        %794 = vmatmul.mubr.bf16.gmra.mxu0 %v756
        %v795 = vpop.f32.mrf.mxu0
        %v796 = vadd.f32 0.0, %v795
        %v797 = vpop.f32.mrf.mxu0
        %v798 = vpop.f32.mrf.mxu0
        %v799 = vpop.f32.mrf.mxu0
        %800 = vdwg.mxu0
        %v801 = vld [vmem:[%s404] sm:$0xff]
        %v802 = vpack.c.bf16 %v801, %v801
        %v803 = vpack.c.bf16 %v796, %v750
        %v805 = vsel %vm591, %v803, 0
        %v808 = vsel %vm711, %v802, 0
        %810 = vmatprep.subr.bf16.mxu0 0
        %811 = vmatpush1.bf16.msra.mxu0 0
        %812 = vmatprep.subr.bf16.mxu0 0
        %813 = vmatpush1.bf16.msra.mxu0 0
        %814 = vmatprep.subr.bf16.mxu0 0
        %815 = vmatpush1.bf16.msra.mxu0 0
        %816 = vmatprep.subr.bf16.mxu0 0
        %817 = vmatpush1.bf16.msra.mxu0 0
        %818 = vmatprep.subr.bf16.mxu0 0
        %819 = vmatpush1.bf16.msra.mxu0 0
        %820 = vmatprep.subr.bf16.mxu0 0
        %821 = vmatpush1.bf16.msra.mxu0 0
        %822 = vmatprep.subr.bf16.mxu0 0
        %823 = vmatpush1.bf16.msra.mxu0 0
        %824 = vmatprep.subr.bf16.mxu0 0
        %825 = vmatpush1.bf16.msra.mxu0 %v808
        %826 = vmatprep.subr.bf16.mxu0 0
        %827 = vmatpush2.bf16.msra.mxu0 0
        %828 = vmatprep.subr.bf16.mxu0 0
        %829 = vmatpush2.bf16.msra.mxu0 0
        %830 = vmatprep.subr.bf16.mxu0 0
        %831 = vmatpush2.bf16.msra.mxu0 0
        %832 = vmatprep.subr.bf16.mxu0 0
        %833 = vmatpush2.bf16.msra.mxu0 0
        %834 = vmatprep.subr.bf16.mxu0 0
        %835 = vmatpush2.bf16.msra.mxu0 0
        %836 = vmatprep.subr.bf16.mxu0 0
        %837 = vmatpush2.bf16.msra.mxu0 0
        %838 = vmatprep.subr.bf16.mxu0 0
        %839 = vmatpush2.bf16.msra.mxu0 0
        %840 = vmatprep.subr.bf16.mxu0 0
        %841 = vmatpush2.bf16.msra.mxu0 0
        %842 = vmatprep.mubr.bf16.mxu0 0
        %843 = vmatmul.mubr.bf16.gmra.mxu0 %v805
        %v844 = vpop.f32.mrf.mxu0
        %v845 = vadd.f32 0.0, %v844
        %v846 = vpop.f32.mrf.mxu0
        %v847 = vpop.f32.mrf.mxu0
        %v848 = vadd.f32 0.0, %v847
        %v849 = vpop.f32.mrf.mxu0
        %850 = vdwg.mxu0
        %v851 = vld [vmem:[#allocation2] sm:$0xff]
        %v852 = vld [vmem:[#allocation2 + $0x8] sm:$0xff]
        %v853 = vadd.f32 %v851, %v845
        %v854 = vadd.f32 %v852, %v848
        %855 = vst.msk [vmem:[#allocation2] sm:$0xff] %vm440, %v853
        %856 = vst.msk [vmem:[#allocation2 + $0x8] sm:$0xff] %vm440, %v854
        %p857 = scmp.eq.s32.totalorder %s24, 3
        // Predicated region
        $region53: #{tpu_custom_call.1} parent=47 // pred_check
          %p858 = pneg %p857
        $region54: #{tpu_custom_call.1} parent=47 // pred_check_branch
          %860 = sbr.rel (%p858) target = $region56
        $region55: #{tpu_custom_call.1} parent=47 // pred_region
          %v861 = vld [vmem:[#allocation2] sm:$0xff]
          %v862 = vld [vmem:[#allocation2 + $0x8] sm:$0xff]
          %863 = vst.msk [vmem:[#allocation3] sm:$0xff] %vm440, %v861
          %864 = vst.msk [vmem:[#allocation3 + $0x8] sm:$0xff] %vm440, %v862
        $region56: #{tpu_custom_call.1} parent=47 // pred_fallthru
          _
        // Predicated region
        $region57: #{tpu_custom_call.1} parent=47 // pred_check
          %p865 = pneg %p231
        $region58: #{tpu_custom_call.1} parent=47 // pred_check_branch
          %867 = sbr.rel (%p865) target = $region60
        $region59: #{tpu_custom_call.1} parent=47 // pred_region
          %s868 = smul.u32 2, %s23
          %s870 = ssub.s32 256, 256
          %871 = vsyncadd [#allocation4], %s870
          %s872 = smul.addr %s868, 128
          %s873 = scalar_lea.hbm %s7, %s872
          %s874 = sshll.u32 [#allocation3], 4
          %s875 = int_to_ptr.vmem [resolvable:$true] %s874
          %880 = dma.vmem_to_hbm [thread:$0]  %s875, 256, %s873, [#allocation4], 128, 128, 8
        $region60: #{tpu_custom_call.1} parent=47 // pred_fallthru
          _
        // Predicated region
        $region61: #{tpu_custom_call.1} parent=47 // pred_check
          %p881 = pneg %p231
        $region62: #{tpu_custom_call.1} parent=47 // pred_check_branch
          %883 = sbr.rel (%p881) target = $region64
        $region63: #{tpu_custom_call.1} parent=47 // pred_region
          %884 = dma.done [#allocation4], 256
        $region64: #{tpu_custom_call.1} parent=47 // pred_fallthru
          _
      $region48: #{tpu_custom_call.1} parent=5 // pred_fallthru
        _
      %p885 = scmp.le.s32.totalorder 2, %s14
      // Predicated region
      $region65: #{tpu_custom_call.1} parent=5 // pred_check
        %p886 = pneg %p885
      $region66: #{tpu_custom_call.1} parent=5 // pred_check_branch
        %888 = sbr.rel (%p886) target = $region68
      $region67: #{tpu_custom_call.1} parent=5 // pred_region
        %s889 = ssub.s32 %s14, 2
      $region68: #{tpu_custom_call.1} parent=5 // pred_fallthru
        _
    $region6: #{tpu_custom_call.1} parent=1 // loop_footer
      %s18 = sadd.s32 1, %s14
    $region7: #{tpu_custom_call.1} parent=1 // loop_footer_branch
      %13 = sbr.rel target = $region3
    $region8: #{tpu_custom_call.1} parent=1 // loop_exit
      _
    %890 = vsyncpa [#allocation4], 1
    %s891 = scalar_lea.sflag [#allocation4], 1
    %892 = vsyncpa %s891, 1

</llo_original>
